<compile_context>
chip_gen: v7x
topology: tpu7x:2x2x1
jax: 0.10.0
libtpu: 0.0.40
codegen_flags: <defaults>
</compile_context>

<pallas_src>
import math

import jax
import jax.numpy as jnp
from jax.experimental import pallas as pl
from jax.experimental.pallas import tpu as pltpu


def _merge_kernel(scaler_ref, x_ref, saved_ref, o_ref):
    # y = x * scaler + saved   (accumulate in f32, cast to output dtype)
    scale = scaler_ref[0]
    y = x_ref[...].astype(jnp.float32) * scale + saved_ref[...].astype(jnp.float32)
    o_ref[...] = y.astype(o_ref.dtype)


def _plan_2d(total):
    """Pick a lane-dense (rows, cols) view; cols a large multiple of 128.

    Returns (rows, cols, padded_total).  If no candidate width divides
    `total`, pad up to a multiple of 1024 (8x128) so all stores stay
    unmasked full-lane vst (narrow out_specs are the big measured penalty).
    """
    total = max(1, total)
    for w in (8192, 4096, 2048, 1024, 512, 256, 128):
        if total % w == 0:
            return total // w, w, total
    padded = ((total + 1023) // 1024) * 1024
    return padded // 1024, 1024, padded


def _merge_2d(scaler, x2d, s2d, out_dtype):
    rows, cols = x2d.shape
    x_item = jnp.dtype(x2d.dtype).itemsize
    s_item = jnp.dtype(s2d.dtype).itemsize
    o_item = jnp.dtype(out_dtype).itemsize

    # Dtype-aware packed-sublane multiple: sub-32-bit dtypes pack 2/4 rows
    # per sublane, so align the row tile to the strictest (smallest) dtype.
    min_item = min(x_item, s_item, o_item)
    sub = 8 * max(1, 4 // min_item)

    # ~2 MiB contiguous row tiles per input block (gains past this are ~1%
    # and larger tiles risk VMEM pressure on v7x's 64 MiB).
    target_bytes = 2 * 1024 * 1024
    tile_r = max(1, target_bytes // max(1, cols * x_item))
    tile_r = min(tile_r, rows)
    if tile_r >= sub:
        tile_r = (tile_r // sub) * sub          # packed-sublane aligned
    elif rows > tile_r:
        tile_r = min(sub, rows)                 # never below one packed tile
    # else: tile_r == rows < sub -> full-extent block, always legal.

    num_steps = pl.cdiv(rows, tile_r)
    # v7x has 2 TensorCores; a single-step grid leaves one idle.  Split until
    # the "parallel" grid axis has >= 2 steps whenever the slab allows it.
    while num_steps < 2 and tile_r > sub:
        tile_r = max(sub, ((tile_r // 2) // sub) * sub)
        num_steps = pl.cdiv(rows, tile_r)

    row_spec = pl.BlockSpec((tile_r, cols), lambda i: (i, 0))

    cost = pl.CostEstimate(
        flops=2 * rows * cols,                              # mul + add per element
        transcendentals=0,
        bytes_accessed=rows * cols * (x_item + s_item + o_item),
    )

    # Alias x into the output when dtypes match: same bytes moved, but no
    # third HBM buffer and XLA can donate x inside larger jitted graphs.
    io_aliases = {1: 0} if jnp.dtype(x2d.dtype) == jnp.dtype(out_dtype) else {}

    return pl.pallas_call(
        _merge_kernel,
        out_shape=jax.ShapeDtypeStruct((rows, cols), out_dtype),
        grid_spec=pltpu.PrefetchScalarGridSpec(
            num_scalar_prefetch=0,
            grid=(num_steps,),
            in_specs=[
                pl.BlockSpec(memory_space=pltpu.MemorySpace.SMEM),  # scaler (1,)
                row_spec,                                           # x
                row_spec,                                           # saved
            ],
            out_specs=row_spec,
        ),
        compiler_params=pltpu.CompilerParams(
            dimension_semantics=("parallel",),
            vmem_limit_bytes=32 * 1024 * 1024,
        ),
        cost_estimate=cost,
        input_output_aliases=io_aliases,
    )(scaler, x2d, s2d)


class Merge:
    """JAX/Pallas port of the PyTorch `Merge` module.

    forward(x, **kwargs) -> {'x': x * scaler + kwargs[self.name]}
    """

    def __init__(self, name="x_saved"):
        self.name = name
        # nn.Parameter(torch.zeros(1)) equivalent (trainable scalar).
        self.scaler = jnp.zeros((1,), dtype=jnp.float32)

    def __call__(self, x, **kwargs):
        saved = kwargs[self.name]
        assert saved.shape == x.shape, (saved.shape, x.shape)

        orig_shape = x.shape
        total = math.prod(orig_shape) if len(orig_shape) > 0 else 1
        rows, cols, padded = _plan_2d(total)

        # Match torch type promotion: x * f32 scaler + saved -> promoted dtype
        # (f32 in the standard all-f32 case).
        out_dtype = jnp.promote_types(
            jnp.promote_types(x.dtype, jnp.float32), saved.dtype)

        xf = x.reshape(-1)
        sf = saved.reshape(-1)
        if padded != total:
            xf = jnp.pad(xf, (0, padded - total))
            sf = jnp.pad(sf, (0, padded - total))

        y2d = _merge_2d(
            self.scaler.astype(jnp.float32),
            xf.reshape(rows, cols),
            sf.reshape(rows, cols),
            out_dtype,
        )

        yf = y2d.reshape(-1)
        if padded != total:
            yf = yf[:total]
        return {"x": yf.reshape(orig_shape)}


if __name__ == "__main__":
    key = jax.random.PRNGKey(0)
    kx, ks = jax.random.split(key)

    # Small NCHW input consistent with the module's usage context.
    x = jax.random.normal(kx, (2, 4, 16, 16), dtype=jnp.float32)
    saved = jax.random.normal(ks, (2, 4, 16, 16), dtype=jnp.float32)

    module = Merge(name="x_saved")
    # Use a nonzero scaler so the scale-and-add path is actually exercised
    # (the zero init would hide a broken multiply).
    module.scaler = jnp.asarray([0.5], dtype=jnp.float32)

    out = module(x, x_saved=saved)
    y = out["x"]
    jax.block_until_ready(y)

    ref = x * module.scaler[0] + saved
    assert y.shape == x.shape, (y.shape, x.shape)
    assert y.dtype == ref.dtype, (y.dtype, ref.dtype)
    assert jnp.allclose(y, ref, rtol=1e-6, atol=1e-6), "merge FMA mismatch"
    assert set(out.keys()) == {"x"}

    print("KERNEL_OK")
</pallas_src>

<mosaic_0001>
module attributes {stable_mosaic.version = 11 : i64} {
  func.func @_merge_kernel(%arg0: i32, %arg1: memref<1xf32, #tpu.memory_space<smem>>, %arg2: memref<1x2048xf32, #tpu.memory_space<vmem>>, %arg3: memref<1x2048xf32, #tpu.memory_space<vmem>>, %arg4: memref<1x2048xf32, #tpu.memory_space<vmem>>) attributes {dimension_semantics = [#tpu.dimension_semantics<parallel>], iteration_bounds = array<i64: 1>, scalar_prefetch = 0 : i64, scratch_operands = 0 : i64, tpu.core_type = #tpu.core_type<tc>, window_params = [{transform_indices = @transform_0, window_bounds = array<i64: 1>}, {transform_indices = @transform_1, window_bounds = array<i64: 1, 2048>}, {transform_indices = @transform_2, window_bounds = array<i64: 1, 2048>}, {transform_indices = @transform_3, window_bounds = array<i64: 1, 2048>}]} {
    %c0 = arith.constant 0 : index
    %0 = memref.load %arg1[%c0] : memref<1xf32, #tpu.memory_space<smem>>
    %c0_0 = arith.constant 0 : index
    %c0_1 = arith.constant 0 : index
    %1 = vector.load %arg2[%c0_0, %c0_1] : memref<1x2048xf32, #tpu.memory_space<vmem>>, vector<1x2048xf32>
    %2 = vector.broadcast %0 : f32 to vector<1x2048xf32>
    %3 = arith.mulf %1, %2 : vector<1x2048xf32>
    %c0_2 = arith.constant 0 : index
    %c0_3 = arith.constant 0 : index
    %4 = vector.load %arg3[%c0_2, %c0_3] : memref<1x2048xf32, #tpu.memory_space<vmem>>, vector<1x2048xf32>
    %5 = arith.addf %3, %4 : vector<1x2048xf32>
    %c0_4 = arith.constant 0 : index
    %c0_5 = arith.constant 0 : index
    %6 = vector.load %arg4[%c0_4, %c0_5] : memref<1x2048xf32, #tpu.memory_space<vmem>>, vector<1x2048xf32>
    tpu.vector_store %arg4[%c0_4, %c0_5], %5 {strides = array<i32>} : memref<1x2048xf32, #tpu.memory_space<vmem>>, vector<1x2048xf32>,
    return
  }
  func.func @transform_0(%arg0: i32) -> i32 {
    %c0_i32 = arith.constant 0 : i32
    %c0_i32_0 = arith.constant 0 : i32
    return %c0_i32 : i32
  }
  func.func @transform_1(%arg0: i32) -> (i32, i32) {
    %c0_i32 = arith.constant 0 : i32
    %c0_i32_0 = arith.constant 0 : i32
    return %arg0, %c0_i32 : i32, i32
  }
  func.func @transform_2(%arg0: i32) -> (i32, i32) {
    %c0_i32 = arith.constant 0 : i32
    %c0_i32_0 = arith.constant 0 : i32
    return %arg0, %c0_i32 : i32, i32
  }
  func.func @transform_3(%arg0: i32) -> (i32, i32) {
    %c0_i32 = arith.constant 0 : i32
    %c0_i32_0 = arith.constant 0 : i32
    return %arg0, %c0_i32 : i32, i32
  }
}

</mosaic_0001>

<llo_original>
// kernel: tpu_custom_call.1
$region0: #{tpu_custom_call.1}
  #allocation0 [shape = 'u32[]', space=smem, size = 0x4, offset = 0x4, fixed_abs, tag = 'smem constant byte address 0x4 - core index']
  #allocation1 [shape = 'u32[144,128]{1,0:T(1,128)}', space=vmem, size = 0x12000, scoped, tag = 'internal scratch']
  #allocation2 [shape = 'f32[1]{0:T(128)S(6)}', space=smem, size = 0x200, scoped, tag = 'scoped memory for tpu_custom_call.1']
  %s0 = inlined_call_operand.<no memory space> [shape: f32[1], index: 0, kind: input, shape index: {}]
  %s1 = inlined_call_operand.hbm [shape: f32[1,2048], index: 1, kind: input, shape index: {}, may-alias: {1,3}]
  %s2 = inlined_call_operand.vmem [shape: f32[1,2048], index: 2, kind: input, shape index: {}]
  %s3 = inlined_call_operand.hbm [shape: f32[1,2048], index: 3, kind: output, shape index: {}, may-alias: {1,3}]
  %s4 = sld [smem:[#allocation0]]
  $region26: #{tpu_custom_call.1} parent=0
    _
  %s6 = ssub.s32 1, %s4
  %s7 = scalar_select 0, %s6, %s4
  %8 = sst [smem:[#allocation2]] %s0
  $region1: #{tpu_custom_call.1} parent=0
    #allocation3 [shape = 'u8[8192]{0}', space=vmem, size = 0x2000, scoped, tag = 'input window, operand 1, single buffered']
    #allocation4 [shape = 's32[1]{0}', space=sflag, size = 0x4, scoped, tag = 'scoped memory for tpu_custom_call.1']
    #allocation5 [shape = 's32[1]{0}', space=sflag, size = 0x4, scoped, tag = 'scoped memory for tpu_custom_call.1']
    #allocation6 [shape = 'u8[8192]{0}', space=vmem, size = 0x2000, scoped, tag = 'output window, operand 0, single buffered']
    %9 = vsyncpa [#allocation4], 0
    %10 = vsyncpa [#allocation5], 0
    // Predicated region
    $region2: #{tpu_custom_call.1} parent=1 // pred_check
      _
    $region3: #{tpu_custom_call.1} parent=1 // pred_check_branch
      %12 = sbr.rel (0) target = $region5
    $region4: #{tpu_custom_call.1} parent=1 // pred_region
      _
    $region5: #{tpu_custom_call.1} parent=1 // pred_fallthru
      _
    // Predicated region
    $region6: #{tpu_custom_call.1} parent=1 // pred_check
      _
    $region7: #{tpu_custom_call.1} parent=1 // pred_check_branch
      %14 = sbr.rel (0) target = $region9
    $region8: #{tpu_custom_call.1} parent=1 // pred_region
      %s16 = ssub.s32 256, 256
      %17 = vsyncadd [#allocation4], %s16
      %s19 = sshll.u32 [#allocation3], 4
      %s20 = int_to_ptr.vmem [resolvable:$true] %s19
      %22 = dma.hbm_to_vmem [thread:$0]  %s1, 256, %s20, [#allocation4]
    $region9: #{tpu_custom_call.1} parent=1 // pred_fallthru
      _
    // Predicated region
    $region10: #{tpu_custom_call.1} parent=1 // pred_check
      _
    $region11: #{tpu_custom_call.1} parent=1 // pred_check_branch
      %24 = sbr.rel (0) target = $region13
    $region12: #{tpu_custom_call.1} parent=1 // pred_region
      _
    $region13: #{tpu_custom_call.1} parent=1 // pred_fallthru
      _
    // Predicated region
    $region14: #{tpu_custom_call.1} parent=1 // pred_check
      _
    $region15: #{tpu_custom_call.1} parent=1 // pred_check_branch
      %26 = sbr.rel (0) target = $region17
    $region16: #{tpu_custom_call.1} parent=1 // pred_region
      %27 = dma.done [#allocation4], 256
    $region17: #{tpu_custom_call.1} parent=1 // pred_fallthru
      _
    %s28 = sld [smem:[#allocation2]]
    %v29 = vld [vmem:[#allocation3] sm:$0xff]
    %v30 = vld [vmem:[#allocation3 + $0x8] sm:$0xff]
    %v31 = vstv %s28
    %v32 = vmul.f32 %v29, %v31
    %v33 = vmul.f32 %v30, %v31
    %v34 = vld [vmem:[%s2] sm:$0xff]
    %v35 = vld [vmem:[%s2 + $0x8] sm:$0xff]
    %v36 = vadd.f32 %v32, %v34
    %v37 = vadd.f32 %v33, %v35
    %38 = vst [vmem:[#allocation6] sm:$0xff] %v36
    %39 = vst [vmem:[#allocation6 + $0x8] sm:$0xff] %v37
    // Predicated region
    $region18: #{tpu_custom_call.1} parent=1 // pred_check
      _
    $region19: #{tpu_custom_call.1} parent=1 // pred_check_branch
      %41 = sbr.rel (0) target = $region21
    $region20: #{tpu_custom_call.1} parent=1 // pred_region
      %s43 = ssub.s32 256, 256
      %44 = vsyncadd [#allocation5], %s43
      %s46 = sshll.u32 [#allocation6], 4
      %s47 = int_to_ptr.vmem [resolvable:$true] %s46
      %49 = dma.vmem_to_hbm [thread:$0]  %s47, 256, %s3, [#allocation5]
    $region21: #{tpu_custom_call.1} parent=1 // pred_fallthru
      _
    // Predicated region
    $region22: #{tpu_custom_call.1} parent=1 // pred_check
      _
    $region23: #{tpu_custom_call.1} parent=1 // pred_check_branch
      %51 = sbr.rel (0) target = $region25
    $region24: #{tpu_custom_call.1} parent=1 // pred_region
      %52 = dma.done [#allocation5], 256
    $region25: #{tpu_custom_call.1} parent=1 // pred_fallthru
      _
    %53 = vsyncpa [#allocation4], 1
    %54 = vsyncpa [#allocation5], 1

</llo_original>
